<compile_context>
chip_gen: v7x
topology: tpu7x:2x2x1
jax: 0.10.0
libtpu: 0.0.40
codegen_flags: <defaults>
</compile_context>

<pallas_src>
import jax
import jax.numpy as jnp
from jax.experimental import pallas as pl
from jax.experimental.pallas import tpu as pltpu


def _round_up(x, m):
    return ((x + m - 1) // m) * m


def mlp_kernel(x_ref, w1_ref, b1_ref, w2_ref, b2_ref, o_ref):
    """x_ref: (IN, TB) VMEM; w1/b1/w2/b2: SMEM; o_ref: (OUT, TB) VMEM.

    Features live on the sublane axis, batch on the lane axis, so every
    VPU op and every store is fully lane-dense.
    """
    in_f = x_ref.shape[0]
    hid = w1_ref.shape[0]
    out_f = w2_ref.shape[0]

    # Hidden layer: unrolled scalar-broadcast FMAs on the VPU (no MXU).
    hs = []
    for j in range(hid):
        h = w1_ref[j, 0] * x_ref[0]                      # (TB,)
        for k in range(1, in_f):
            h = h + w1_ref[j, k] * x_ref[k]
        h = h + b1_ref[j]
        hs.append(jnp.maximum(h, 0.0))                   # ReLU

    # Dropout(0.2): identity in eval mode.

    # Output layer: same unrolled VPU FMA pattern.
    for m in range(out_f):
        o = w2_ref[m, 0] * hs[0]
        for j in range(1, hid):
            o = o + w2_ref[m, j] * hs[j]
        o = o + b2_ref[m]
        o_ref[m, :] = o.astype(o_ref.dtype)              # lane-dense store


def mlp_forward(x, w1, b1, w2, b2):
    """x: (B, in_f) f32; w1: (hid, in_f); b1: (hid,); w2: (out_f, hid); b2: (out_f,)."""
    B, in_f = x.shape
    hid = w1.shape[0]
    out_f = w2.shape[0]

    LANE = 128
    # Lane tile for the batch axis: multiple of 128, capped so double-buffered
    # input+output tiles stay tiny relative to VMEM (safe even on v7x's 64 MiB).
    tb = _round_up(min(max(B, 1), 512), LANE)
    b_pad = _round_up(B, tb)

    # Batch -> lane axis: transpose and zero-pad the batch dimension.
    x_t = jnp.zeros((in_f, b_pad), dtype=x.dtype).at[:, :B].set(x.T)

    smem_spec = pl.BlockSpec(memory_space=pltpu.MemorySpace.SMEM)

    out_t = pl.pallas_call(
        mlp_kernel,
        out_shape=jax.ShapeDtypeStruct((out_f, b_pad), x.dtype),
        grid=(b_pad // tb,),
        in_specs=[
            pl.BlockSpec((in_f, tb), lambda i: (0, i)),  # activation tile (VMEM)
            smem_spec,  # w1
            smem_spec,  # b1
            smem_spec,  # w2
            smem_spec,  # b2
        ],
        out_specs=pl.BlockSpec((out_f, tb), lambda i: (0, i)),
        compiler_params=pltpu.CompilerParams(
            dimension_semantics=("parallel",)),
    )(x_t, w1, b1, w2, b2)

    # Back to (B, out_f), dropping batch padding.
    return out_t[:, :B].T


def init_linear_params(key, in_features, out_features):
    """Deterministic init matching PyTorch nn.Linear's U(-1/sqrt(fan_in), ...).

    Weights are stored in PyTorch layout: (out_features, in_features).
    """
    kw, kb = jax.random.split(key)
    bound = 1.0 / jnp.sqrt(jnp.float32(in_features))
    w = jax.random.uniform(kw, (out_features, in_features),
                           minval=-bound, maxval=bound, dtype=jnp.float32)
    b = jax.random.uniform(kb, (out_features,),
                           minval=-bound, maxval=bound, dtype=jnp.float32)
    return w, b


if __name__ == "__main__":
    key = jax.random.PRNGKey(0)
    k_x, k_l1, k_l2 = jax.random.split(key, 3)

    B = 8
    x = jax.random.normal(k_x, (B, 4), dtype=jnp.float32)

    w1, b1 = init_linear_params(k_l1, 4, 3)   # Linear(4, 3)
    w2, b2 = init_linear_params(k_l2, 3, 1)   # Linear(3, 1)

    out = mlp_forward(x, w1, b1, w2, b2)
    out = jax.block_until_ready(out)

    # Sanity check vs. plain-JAX reference (eval-mode: dropout is identity).
    ref = jnp.maximum(x @ w1.T + b1, 0.0) @ w2.T + b2
    assert out.shape == (B, 1)
    assert jnp.allclose(out, ref, atol=1e-5, rtol=1e-5)

    print("KERNEL_OK")
</pallas_src>

<mosaic_0001>
module attributes {stable_mosaic.version = 11 : i64} {
  func.func @mlp_kernel(%arg0: i32, %arg1: memref<4x128xf32, #tpu.memory_space<vmem>>, %arg2: memref<3x4xf32, #tpu.memory_space<smem>>, %arg3: memref<3xf32, #tpu.memory_space<smem>>, %arg4: memref<1x3xf32, #tpu.memory_space<smem>>, %arg5: memref<1xf32, #tpu.memory_space<smem>>, %arg6: memref<1x128xf32, #tpu.memory_space<vmem>>) attributes {dimension_semantics = [#tpu.dimension_semantics<parallel>], iteration_bounds = array<i64: 1>, scalar_prefetch = 0 : i64, scratch_operands = 0 : i64, tpu.core_type = #tpu.core_type<tc>, window_params = [{transform_indices = @transform_0, window_bounds = array<i64: 4, 128>}, {transform_indices = @transform_1, window_bounds = array<i64: 3, 4>}, {transform_indices = @transform_2, window_bounds = array<i64: 3>}, {transform_indices = @transform_3, window_bounds = array<i64: 1, 3>}, {transform_indices = @transform_4, window_bounds = array<i64: 1>}, {transform_indices = @transform_5, window_bounds = array<i64: 1, 128>}]} {
    %c0 = arith.constant 0 : index
    %c0_0 = arith.constant 0 : index
    %0 = memref.load %arg2[%c0, %c0_0] : memref<3x4xf32, #tpu.memory_space<smem>>
    %c0_1 = arith.constant 0 : index
    %c0_2 = arith.constant 0 : index
    %1 = vector.load %arg1[%c0_1, %c0_2] : memref<4x128xf32, #tpu.memory_space<vmem>>, vector<1x128xf32>
    %2 = vector.shape_cast %1 : vector<1x128xf32> to vector<128xf32>
    %3 = vector.broadcast %0 : f32 to vector<128xf32>
    %4 = arith.mulf %3, %2 : vector<128xf32>
    %c0_3 = arith.constant 0 : index
    %c1 = arith.constant 1 : index
    %5 = memref.load %arg2[%c0_3, %c1] : memref<3x4xf32, #tpu.memory_space<smem>>
    %c1_4 = arith.constant 1 : index
    %c0_5 = arith.constant 0 : index
    %6 = vector.load %arg1[%c1_4, %c0_5] : memref<4x128xf32, #tpu.memory_space<vmem>>, vector<1x128xf32>
    %7 = vector.shape_cast %6 : vector<1x128xf32> to vector<128xf32>
    %8 = vector.broadcast %5 : f32 to vector<128xf32>
    %9 = arith.mulf %8, %7 : vector<128xf32>
    %10 = arith.addf %4, %9 : vector<128xf32>
    %c0_6 = arith.constant 0 : index
    %c2 = arith.constant 2 : index
    %11 = memref.load %arg2[%c0_6, %c2] : memref<3x4xf32, #tpu.memory_space<smem>>
    %c2_7 = arith.constant 2 : index
    %c0_8 = arith.constant 0 : index
    %12 = vector.load %arg1[%c2_7, %c0_8] : memref<4x128xf32, #tpu.memory_space<vmem>>, vector<1x128xf32>
    %13 = vector.shape_cast %12 : vector<1x128xf32> to vector<128xf32>
    %14 = vector.broadcast %11 : f32 to vector<128xf32>
    %15 = arith.mulf %14, %13 : vector<128xf32>
    %16 = arith.addf %10, %15 : vector<128xf32>
    %c0_9 = arith.constant 0 : index
    %c3 = arith.constant 3 : index
    %17 = memref.load %arg2[%c0_9, %c3] : memref<3x4xf32, #tpu.memory_space<smem>>
    %c3_10 = arith.constant 3 : index
    %c0_11 = arith.constant 0 : index
    %18 = vector.load %arg1[%c3_10, %c0_11] : memref<4x128xf32, #tpu.memory_space<vmem>>, vector<1x128xf32>
    %19 = vector.shape_cast %18 : vector<1x128xf32> to vector<128xf32>
    %20 = vector.broadcast %17 : f32 to vector<128xf32>
    %21 = arith.mulf %20, %19 : vector<128xf32>
    %22 = arith.addf %16, %21 : vector<128xf32>
    %c0_12 = arith.constant 0 : index
    %23 = memref.load %arg3[%c0_12] : memref<3xf32, #tpu.memory_space<smem>>
    %24 = vector.broadcast %23 : f32 to vector<128xf32>
    %25 = arith.addf %22, %24 : vector<128xf32>
    %cst = arith.constant 0.000000e+00 : f32
    %26 = vector.broadcast %cst : f32 to vector<128xf32>
    %27 = arith.maximumf %25, %26 : vector<128xf32>
    %c1_13 = arith.constant 1 : index
    %c0_14 = arith.constant 0 : index
    %28 = memref.load %arg2[%c1_13, %c0_14] : memref<3x4xf32, #tpu.memory_space<smem>>
    %c0_15 = arith.constant 0 : index
    %c0_16 = arith.constant 0 : index
    %29 = vector.load %arg1[%c0_15, %c0_16] : memref<4x128xf32, #tpu.memory_space<vmem>>, vector<1x128xf32>
    %30 = vector.shape_cast %29 : vector<1x128xf32> to vector<128xf32>
    %31 = vector.broadcast %28 : f32 to vector<128xf32>
    %32 = arith.mulf %31, %30 : vector<128xf32>
    %c1_17 = arith.constant 1 : index
    %c1_18 = arith.constant 1 : index
    %33 = memref.load %arg2[%c1_17, %c1_18] : memref<3x4xf32, #tpu.memory_space<smem>>
    %c1_19 = arith.constant 1 : index
    %c0_20 = arith.constant 0 : index
    %34 = vector.load %arg1[%c1_19, %c0_20] : memref<4x128xf32, #tpu.memory_space<vmem>>, vector<1x128xf32>
    %35 = vector.shape_cast %34 : vector<1x128xf32> to vector<128xf32>
    %36 = vector.broadcast %33 : f32 to vector<128xf32>
    %37 = arith.mulf %36, %35 : vector<128xf32>
    %38 = arith.addf %32, %37 : vector<128xf32>
    %c1_21 = arith.constant 1 : index
    %c2_22 = arith.constant 2 : index
    %39 = memref.load %arg2[%c1_21, %c2_22] : memref<3x4xf32, #tpu.memory_space<smem>>
    %c2_23 = arith.constant 2 : index
    %c0_24 = arith.constant 0 : index
    %40 = vector.load %arg1[%c2_23, %c0_24] : memref<4x128xf32, #tpu.memory_space<vmem>>, vector<1x128xf32>
    %41 = vector.shape_cast %40 : vector<1x128xf32> to vector<128xf32>
    %42 = vector.broadcast %39 : f32 to vector<128xf32>
    %43 = arith.mulf %42, %41 : vector<128xf32>
    %44 = arith.addf %38, %43 : vector<128xf32>
    %c1_25 = arith.constant 1 : index
    %c3_26 = arith.constant 3 : index
    %45 = memref.load %arg2[%c1_25, %c3_26] : memref<3x4xf32, #tpu.memory_space<smem>>
    %c3_27 = arith.constant 3 : index
    %c0_28 = arith.constant 0 : index
    %46 = vector.load %arg1[%c3_27, %c0_28] : memref<4x128xf32, #tpu.memory_space<vmem>>, vector<1x128xf32>
    %47 = vector.shape_cast %46 : vector<1x128xf32> to vector<128xf32>
    %48 = vector.broadcast %45 : f32 to vector<128xf32>
    %49 = arith.mulf %48, %47 : vector<128xf32>
    %50 = arith.addf %44, %49 : vector<128xf32>
    %c1_29 = arith.constant 1 : index
    %51 = memref.load %arg3[%c1_29] : memref<3xf32, #tpu.memory_space<smem>>
    %52 = vector.broadcast %51 : f32 to vector<128xf32>
    %53 = arith.addf %50, %52 : vector<128xf32>
    %cst_30 = arith.constant 0.000000e+00 : f32
    %54 = vector.broadcast %cst_30 : f32 to vector<128xf32>
    %55 = arith.maximumf %53, %54 : vector<128xf32>
    %c2_31 = arith.constant 2 : index
    %c0_32 = arith.constant 0 : index
    %56 = memref.load %arg2[%c2_31, %c0_32] : memref<3x4xf32, #tpu.memory_space<smem>>
    %c0_33 = arith.constant 0 : index
    %c0_34 = arith.constant 0 : index
    %57 = vector.load %arg1[%c0_33, %c0_34] : memref<4x128xf32, #tpu.memory_space<vmem>>, vector<1x128xf32>
    %58 = vector.shape_cast %57 : vector<1x128xf32> to vector<128xf32>
    %59 = vector.broadcast %56 : f32 to vector<128xf32>
    %60 = arith.mulf %59, %58 : vector<128xf32>
    %c2_35 = arith.constant 2 : index
    %c1_36 = arith.constant 1 : index
    %61 = memref.load %arg2[%c2_35, %c1_36] : memref<3x4xf32, #tpu.memory_space<smem>>
    %c1_37 = arith.constant 1 : index
    %c0_38 = arith.constant 0 : index
    %62 = vector.load %arg1[%c1_37, %c0_38] : memref<4x128xf32, #tpu.memory_space<vmem>>, vector<1x128xf32>
    %63 = vector.shape_cast %62 : vector<1x128xf32> to vector<128xf32>
    %64 = vector.broadcast %61 : f32 to vector<128xf32>
    %65 = arith.mulf %64, %63 : vector<128xf32>
    %66 = arith.addf %60, %65 : vector<128xf32>
    %c2_39 = arith.constant 2 : index
    %c2_40 = arith.constant 2 : index
    %67 = memref.load %arg2[%c2_39, %c2_40] : memref<3x4xf32, #tpu.memory_space<smem>>
    %c2_41 = arith.constant 2 : index
    %c0_42 = arith.constant 0 : index
    %68 = vector.load %arg1[%c2_41, %c0_42] : memref<4x128xf32, #tpu.memory_space<vmem>>, vector<1x128xf32>
    %69 = vector.shape_cast %68 : vector<1x128xf32> to vector<128xf32>
    %70 = vector.broadcast %67 : f32 to vector<128xf32>
    %71 = arith.mulf %70, %69 : vector<128xf32>
    %72 = arith.addf %66, %71 : vector<128xf32>
    %c2_43 = arith.constant 2 : index
    %c3_44 = arith.constant 3 : index
    %73 = memref.load %arg2[%c2_43, %c3_44] : memref<3x4xf32, #tpu.memory_space<smem>>
    %c3_45 = arith.constant 3 : index
    %c0_46 = arith.constant 0 : index
    %74 = vector.load %arg1[%c3_45, %c0_46] : memref<4x128xf32, #tpu.memory_space<vmem>>, vector<1x128xf32>
    %75 = vector.shape_cast %74 : vector<1x128xf32> to vector<128xf32>
    %76 = vector.broadcast %73 : f32 to vector<128xf32>
    %77 = arith.mulf %76, %75 : vector<128xf32>
    %78 = arith.addf %72, %77 : vector<128xf32>
    %c2_47 = arith.constant 2 : index
    %79 = memref.load %arg3[%c2_47] : memref<3xf32, #tpu.memory_space<smem>>
    %80 = vector.broadcast %79 : f32 to vector<128xf32>
    %81 = arith.addf %78, %80 : vector<128xf32>
    %cst_48 = arith.constant 0.000000e+00 : f32
    %82 = vector.broadcast %cst_48 : f32 to vector<128xf32>
    %83 = arith.maximumf %81, %82 : vector<128xf32>
    %c0_49 = arith.constant 0 : index
    %c0_50 = arith.constant 0 : index
    %84 = memref.load %arg4[%c0_49, %c0_50] : memref<1x3xf32, #tpu.memory_space<smem>>
    %85 = vector.broadcast %84 : f32 to vector<128xf32>
    %86 = arith.mulf %85, %27 : vector<128xf32>
    %c0_51 = arith.constant 0 : index
    %c1_52 = arith.constant 1 : index
    %87 = memref.load %arg4[%c0_51, %c1_52] : memref<1x3xf32, #tpu.memory_space<smem>>
    %88 = vector.broadcast %87 : f32 to vector<128xf32>
    %89 = arith.mulf %88, %55 : vector<128xf32>
    %90 = arith.addf %86, %89 : vector<128xf32>
    %c0_53 = arith.constant 0 : index
    %c2_54 = arith.constant 2 : index
    %91 = memref.load %arg4[%c0_53, %c2_54] : memref<1x3xf32, #tpu.memory_space<smem>>
    %92 = vector.broadcast %91 : f32 to vector<128xf32>
    %93 = arith.mulf %92, %83 : vector<128xf32>
    %94 = arith.addf %90, %93 : vector<128xf32>
    %c0_55 = arith.constant 0 : index
    %95 = memref.load %arg5[%c0_55] : memref<1xf32, #tpu.memory_space<smem>>
    %96 = vector.broadcast %95 : f32 to vector<128xf32>
    %97 = arith.addf %94, %96 : vector<128xf32>
    %c0_56 = arith.constant 0 : index
    %c0_57 = arith.constant 0 : index
    %98 = vector.load %arg6[%c0_56, %c0_57] : memref<1x128xf32, #tpu.memory_space<vmem>>, vector<1x128xf32>
    %99 = vector.shape_cast %98 : vector<1x128xf32> to vector<128xf32>
    %100 = vector.shape_cast %97 : vector<128xf32> to vector<1x128xf32>
    tpu.vector_store %arg6[%c0_56, %c0_57], %100 {strides = array<i32>} : memref<1x128xf32, #tpu.memory_space<vmem>>, vector<1x128xf32>,
    return
  }
  func.func @transform_0(%arg0: i32) -> (i32, i32) {
    %c0_i32 = arith.constant 0 : i32
    %c0_i32_0 = arith.constant 0 : i32
    return %c0_i32, %arg0 : i32, i32
  }
  func.func @transform_1(%arg0: i32) -> (i32, i32) {
    %c0_i32 = arith.constant 0 : i32
    %c0_i32_0 = arith.constant 0 : i32
    %c0_i32_1 = arith.constant 0 : i32
    return %c0_i32, %c0_i32_0 : i32, i32
  }
  func.func @transform_2(%arg0: i32) -> i32 {
    %c0_i32 = arith.constant 0 : i32
    %c0_i32_0 = arith.constant 0 : i32
    return %c0_i32 : i32
  }
  func.func @transform_3(%arg0: i32) -> (i32, i32) {
    %c0_i32 = arith.constant 0 : i32
    %c0_i32_0 = arith.constant 0 : i32
    %c0_i32_1 = arith.constant 0 : i32
    return %c0_i32, %c0_i32_0 : i32, i32
  }
  func.func @transform_4(%arg0: i32) -> i32 {
    %c0_i32 = arith.constant 0 : i32
    %c0_i32_0 = arith.constant 0 : i32
    return %c0_i32 : i32
  }
  func.func @transform_5(%arg0: i32) -> (i32, i32) {
    %c0_i32 = arith.constant 0 : i32
    %c0_i32_0 = arith.constant 0 : i32
    return %c0_i32, %arg0 : i32, i32
  }
}

</mosaic_0001>

<llo_original>
// kernel: tpu_custom_call.1
$region0: #{tpu_custom_call.1}
  #allocation0 [shape = 'u32[]', space=smem, size = 0x4, offset = 0x4, fixed_abs, tag = 'smem constant byte address 0x4 - core index']
  #allocation1 [shape = 'u32[144,128]{1,0:T(1,128)}', space=vmem, size = 0x12000, scoped, tag = 'internal scratch']
  #allocation2 [shape = 'f32[1]{0:T(128)S(6)}', space=smem, size = 0x200, scoped, tag = 'scoped memory for tpu_custom_call.1']
  %s0 = inlined_call_operand.hbm [shape: f32[4,128], index: 0, kind: input, shape index: {}]
  %s1 = inlined_call_operand.vmem [shape: f32[3,4], index: 1, kind: input, shape index: {}]
  %s2 = inlined_call_operand.vmem [shape: f32[3], index: 2, kind: input, shape index: {}]
  %s3 = inlined_call_operand.vmem [shape: f32[1,3], index: 3, kind: input, shape index: {}]
  %s4 = inlined_call_operand.<no memory space> [shape: f32[1], index: 4, kind: input, shape index: {}]
  %s5 = inlined_call_operand.hbm [shape: f32[1,128], index: 5, kind: output, shape index: {}]
  %s6 = sld [smem:[#allocation0]]
  $region46: #{tpu_custom_call.1} parent=0
    _
  %s8 = ssub.s32 1, %s6
  %s9 = scalar_select 0, %s8, %s6
  %10 = sst [smem:[#allocation2]] %s4
  $region1: #{tpu_custom_call.1} parent=0
    #allocation3 [shape = 'u8[2048]{0}', space=vmem, size = 0x800, scoped, tag = 'input window, operand 0, single buffered']
    #allocation4 [shape = 's32[1]{0}', space=sflag, size = 0x4, scoped, tag = 'scoped memory for tpu_custom_call.1']
    #allocation5 [shape = 's32[1]{0}', space=sflag, size = 0x4, scoped, tag = 'scoped memory for tpu_custom_call.1']
    #allocation6 [shape = 's32[1]{0}', space=sflag, size = 0x4, scoped, tag = 'scoped memory for tpu_custom_call.1']
    #allocation7 [shape = 'u8[2048]{0}', space=smem, size = 0x800, scoped, tag = 'input window, operand 1, single buffered']
    #allocation8 [shape = 'u8[512]{0}', space=smem, size = 0x200, scoped, tag = 'input window, operand 2, single buffered']
    #allocation9 [shape = 's32[1]{0}', space=sflag, size = 0x4, scoped, tag = 'scoped memory for tpu_custom_call.1']
    #allocation10 [shape = 'u8[512]{0}', space=smem, size = 0x200, scoped, tag = 'input window, operand 3, single buffered']
    #allocation11 [shape = 'u8[512]{0}', space=vmem, size = 0x400, scoped, tag = 'output window, operand 0, single buffered']
    %11 = vsyncpa [#allocation4], 0
    %12 = vsyncpa [#allocation6], 0
    %13 = vsyncpa [#allocation9], 0
    %14 = vsyncpa [#allocation5], 0
    // Predicated region
    $region2: #{tpu_custom_call.1} parent=1 // pred_check
      _
    $region3: #{tpu_custom_call.1} parent=1 // pred_check_branch
      %16 = sbr.rel (0) target = $region5
    $region4: #{tpu_custom_call.1} parent=1 // pred_region
      %s18 = ssub.s32 64, 64
      %19 = vsyncadd [#allocation4], %s18
      %s21 = sshll.u32 [#allocation3], 4
      %s22 = int_to_ptr.vmem [resolvable:$true] %s21
      %24 = dma.hbm_to_vmem [thread:$0]  %s0, 64, %s22, [#allocation4]
    $region5: #{tpu_custom_call.1} parent=1 // pred_fallthru
      _
    // Predicated region
    $region6: #{tpu_custom_call.1} parent=1 // pred_check
      _
    $region7: #{tpu_custom_call.1} parent=1 // pred_check_branch
      %26 = sbr.rel (0) target = $region9
    $region8: #{tpu_custom_call.1} parent=1 // pred_region
      %s28 = ssub.s32 64, 64
      %29 = vsyncadd [#allocation6], %s28
      %s31 = sshll.u32 %s1, 4
      %s32 = int_to_ptr.vmem [resolvable:$true] %s31
      %34 = dma.vmem_to_smem %s32, 64, [#allocation7], [#allocation6]
    $region9: #{tpu_custom_call.1} parent=1 // pred_fallthru
      _
    // Predicated region
    $region10: #{tpu_custom_call.1} parent=1 // pred_check
      _
    $region11: #{tpu_custom_call.1} parent=1 // pred_check_branch
      %36 = sbr.rel (0) target = $region13
    $region12: #{tpu_custom_call.1} parent=1 // pred_region
      %s38 = ssub.s32 16, 16
      %39 = vsyncadd [#allocation9], %s38
      %s41 = sshll.u32 %s2, 4
      %s42 = int_to_ptr.vmem [resolvable:$true] %s41
      %44 = dma.vmem_to_smem %s42, 16, [#allocation8], [#allocation9]
    $region13: #{tpu_custom_call.1} parent=1 // pred_fallthru
      _
    // Predicated region
    $region14: #{tpu_custom_call.1} parent=1 // pred_check
      _
    $region15: #{tpu_custom_call.1} parent=1 // pred_check_branch
      %46 = sbr.rel (0) target = $region17
    $region16: #{tpu_custom_call.1} parent=1 // pred_region
      %s48 = ssub.s32 16, 16
      %49 = vsyncadd [#allocation9], %s48
      %s51 = sshll.u32 %s3, 4
      %s52 = int_to_ptr.vmem [resolvable:$true] %s51
      %54 = dma.vmem_to_smem %s52, 16, [#allocation10], [#allocation9]
    $region17: #{tpu_custom_call.1} parent=1 // pred_fallthru
      _
    // Predicated region
    $region18: #{tpu_custom_call.1} parent=1 // pred_check
      _
    $region19: #{tpu_custom_call.1} parent=1 // pred_check_branch
      %56 = sbr.rel (0) target = $region21
    $region20: #{tpu_custom_call.1} parent=1 // pred_region
      _
    $region21: #{tpu_custom_call.1} parent=1 // pred_fallthru
      _
    // Predicated region
    $region22: #{tpu_custom_call.1} parent=1 // pred_check
      _
    $region23: #{tpu_custom_call.1} parent=1 // pred_check_branch
      %58 = sbr.rel (0) target = $region25
    $region24: #{tpu_custom_call.1} parent=1 // pred_region
      %59 = dma.done [#allocation4], 64
    $region25: #{tpu_custom_call.1} parent=1 // pred_fallthru
      _
    // Predicated region
    $region26: #{tpu_custom_call.1} parent=1 // pred_check
      _
    $region27: #{tpu_custom_call.1} parent=1 // pred_check_branch
      %61 = sbr.rel (0) target = $region29
    $region28: #{tpu_custom_call.1} parent=1 // pred_region
      %62 = dma.done [#allocation6], 64
    $region29: #{tpu_custom_call.1} parent=1 // pred_fallthru
      _
    // Predicated region
    $region30: #{tpu_custom_call.1} parent=1 // pred_check
      _
    $region31: #{tpu_custom_call.1} parent=1 // pred_check_branch
      %64 = sbr.rel (0) target = $region33
    $region32: #{tpu_custom_call.1} parent=1 // pred_region
      %65 = dma.done [#allocation9], 16
    $region33: #{tpu_custom_call.1} parent=1 // pred_fallthru
      _
    // Predicated region
    $region34: #{tpu_custom_call.1} parent=1 // pred_check
      _
    $region35: #{tpu_custom_call.1} parent=1 // pred_check_branch
      %67 = sbr.rel (0) target = $region37
    $region36: #{tpu_custom_call.1} parent=1 // pred_region
      %68 = dma.done [#allocation9], 16
    $region37: #{tpu_custom_call.1} parent=1 // pred_fallthru
      _
    %69 = sfence
    %s70 = sld [smem:[#allocation7]]
    %v71 = vld [vmem:[#allocation3] sm:$0x1]
    %v72 = vstv %s70
    %v73 = vmul.f32 %v72, %v71
    %s74 = sld [smem:[#allocation7 + $0x1]]
    %v75 = vld [vmem:[#allocation3 + $0x1] sm:$0x1]
    %v76 = vstv %s74
    %v77 = vmul.f32 %v76, %v75
    %v78 = vadd.f32 %v73, %v77
    %s79 = sld [smem:[#allocation7 + $0x2]]
    %v80 = vld [vmem:[#allocation3 + $0x2] sm:$0x1]
    %v81 = vstv %s79
    %v82 = vmul.f32 %v81, %v80
    %v83 = vadd.f32 %v78, %v82
    %s84 = sld [smem:[#allocation7 + $0x3]]
    %v85 = vld [vmem:[#allocation3 + $0x3] sm:$0x1]
    %v86 = vstv %s84
    %v87 = vmul.f32 %v86, %v85
    %v88 = vadd.f32 %v83, %v87
    %s89 = sld [smem:[#allocation8]]
    %v90 = vstv %s89
    %v91 = vadd.f32 %v88, %v90
    %v92 = vmax.f32 %v91, 0.0
    %s93 = sld [smem:[#allocation7 + $0x80]]
    %v94 = vstv %s93
    %v95 = vmul.f32 %v94, %v71
    %s96 = sld [smem:[#allocation7 + $0x81]]
    %v97 = vstv %s96
    %v98 = vmul.f32 %v97, %v75
    %v99 = vadd.f32 %v95, %v98
    %s100 = sld [smem:[#allocation7 + $0x82]]
    %v101 = vstv %s100
    %v102 = vmul.f32 %v101, %v80
    %v103 = vadd.f32 %v99, %v102
    %s104 = sld [smem:[#allocation7 + $0x83]]
    %v105 = vstv %s104
    %v106 = vmul.f32 %v105, %v85
    %v107 = vadd.f32 %v103, %v106
    %s108 = sld [smem:[#allocation8 + $0x1]]
    %v109 = vstv %s108
    %v110 = vadd.f32 %v107, %v109
    %v111 = vmax.f32 %v110, 0.0
    %s112 = sld [smem:[#allocation7 + $0x100]]
    %v113 = vstv %s112
    %v114 = vmul.f32 %v113, %v71
    %s115 = sld [smem:[#allocation7 + $0x101]]
    %v116 = vstv %s115
    %v117 = vmul.f32 %v116, %v75
    %v118 = vadd.f32 %v114, %v117
    %s119 = sld [smem:[#allocation7 + $0x102]]
    %v120 = vstv %s119
    %v121 = vmul.f32 %v120, %v80
    %v122 = vadd.f32 %v118, %v121
    %s123 = sld [smem:[#allocation7 + $0x103]]
    %v124 = vstv %s123
    %v125 = vmul.f32 %v124, %v85
    %v126 = vadd.f32 %v122, %v125
    %s127 = sld [smem:[#allocation8 + $0x2]]
    %v128 = vstv %s127
    %v129 = vadd.f32 %v126, %v128
    %v130 = vmax.f32 %v129, 0.0
    %s131 = sld [smem:[#allocation10]]
    %v132 = vstv %s131
    %v133 = vmul.f32 %v132, %v92
    %s134 = sld [smem:[#allocation10 + $0x1]]
    %v135 = vstv %s134
    %v136 = vmul.f32 %v135, %v111
    %v137 = vadd.f32 %v133, %v136
    %s138 = sld [smem:[#allocation10 + $0x2]]
    %v139 = vstv %s138
    %v140 = vmul.f32 %v139, %v130
    %v141 = vadd.f32 %v137, %v140
    %s142 = sld [smem:[#allocation2]]
    %v143 = vstv %s142
    %v144 = vadd.f32 %v141, %v143
    %145 = vst [vmem:[#allocation11] sm:$0x1] %v144
    // Predicated region
    $region38: #{tpu_custom_call.1} parent=1 // pred_check
      _
    $region39: #{tpu_custom_call.1} parent=1 // pred_check_branch
      %147 = sbr.rel (0) target = $region41
    $region40: #{tpu_custom_call.1} parent=1 // pred_region
      %s149 = ssub.s32 16, 16
      %150 = vsyncadd [#allocation5], %s149
      %s152 = sshll.u32 [#allocation11], 4
      %s153 = int_to_ptr.vmem [resolvable:$true] %s152
      %155 = dma.vmem_to_hbm [thread:$0]  %s153, 16, %s5, [#allocation5]
    $region41: #{tpu_custom_call.1} parent=1 // pred_fallthru
      _
    // Predicated region
    $region42: #{tpu_custom_call.1} parent=1 // pred_check
      _
    $region43: #{tpu_custom_call.1} parent=1 // pred_check_branch
      %157 = sbr.rel (0) target = $region45
    $region44: #{tpu_custom_call.1} parent=1 // pred_region
      %158 = dma.done [#allocation5], 16
    $region45: #{tpu_custom_call.1} parent=1 // pred_fallthru
      _
    %159 = vsyncpa [#allocation4], 1
    %160 = vsyncpa [#allocation5], 1
    %161 = vsyncpa [#allocation6], 1
    %162 = vsyncpa [#allocation9], 1

</llo_original>
